<compile_context>
chip_gen: v7x
topology: tpu7x:2x2x1
jax: 0.10.0
libtpu: 0.0.40
codegen_flags: <defaults>
</compile_context>

<pallas_src>
import jax
import jax.numpy as jnp
from jax.experimental import pallas as pl
from jax.experimental.pallas import tpu as pltpu


def mlp_kernel(w1_ref, b1_ref, w2_ref, b2_ref, w3_ref, b3_ref, x_ref, o_ref):
    # x_ref: (n_in, bt) -- batch on lanes.  Whole hot path fused in one body.
    x = x_ref[...]
    h1 = jnp.maximum(
        jnp.dot(w1_ref[...], x, preferred_element_type=jnp.float32) + b1_ref[...],
        0.0)                                              # (5, bt)
    h2 = jnp.maximum(
        jnp.dot(w2_ref[...], h1, preferred_element_type=jnp.float32) + b2_ref[...],
        0.0)                                              # (3, bt)
    z = jnp.dot(w3_ref[...], h2, preferred_element_type=jnp.float32) + b3_ref[...]
    o_ref[...] = jax.nn.sigmoid(z)                        # (n_out, bt), lane-dense


def _pick_batch_tile(B):
    """Lane-aligned (multiple of 128) batch tile.

    Prefers a tile that (a) amortizes the ~0.35us per-grid-step overhead and
    (b) keeps the grid multi-step so v7x's two TensorCores both get work and
    DMA is pipelined.  Falls back to a full-extent block for tiny/ragged B.
    """
    for bt in (4096, 2048, 1024, 512, 256, 128):
        if B % bt == 0 and B // bt >= 2:
            return bt
    for bt in (4096, 2048, 1024, 512, 256, 128):
        if B % bt == 0:
            return bt
    return B  # full-extent fallback (block equals array dim, always legal)


def mynet_forward(x, params, *, bt=None):
    """MyNet forward: sigmoid(L3(relu(L2(relu(L1(x)))))).

    x:      (B, n_in) float32
    params: w1 (5, n_in), b1 (5, 1), w2 (3, 5), b2 (3, 1),
            w3 (n_out, 3), b3 (n_out, 1)   -- PyTorch (out, in) weight layout.
    Returns (B, n_out) float32.
    """
    B, n_in = x.shape
    n_out = params["w3"].shape[0]

    if bt is None:
        bt = _pick_batch_tile(B)
    # (8,128) rule: the lane (last) dim of every block must be a multiple of 128
    # or equal the full array extent.
    assert bt == B or (bt % 128 == 0 and B % bt == 0), (
        f"batch tile {bt} must equal B or be a multiple of 128 dividing B={B}")

    w1, b1 = params["w1"], params["b1"]
    w2, b2 = params["w2"], params["b2"]
    w3, b3 = params["w3"], params["b3"]

    # Feature-major view of the input: (n_in, B).  Pure layout plumbing.
    x_t = jnp.transpose(x)

    grid = (B // bt,)
    # Weights/biases are tiny (<1 KiB total): full-extent resident blocks.
    const = lambda a: pl.BlockSpec(a.shape, lambda i: (0, 0))

    # Per-step VMEM (double-buffered x + out tiles) is < 1.5 MiB even at
    # bt=4096 with n_in=32, so the default scoped VMEM limit is ample on
    # v5e/v6e/v7x alike.
    out_t = pl.pallas_call(
        mlp_kernel,
        out_shape=jax.ShapeDtypeStruct((n_out, B), jnp.float32),
        grid_spec=pltpu.PrefetchScalarGridSpec(
            num_scalar_prefetch=0,
            grid=grid,
            in_specs=[
                const(w1), const(b1),
                const(w2), const(b2),
                const(w3), const(b3),
                pl.BlockSpec((n_in, bt), lambda i: (0, i)),   # x tile, batch on lanes
            ],
            out_specs=pl.BlockSpec((n_out, bt), lambda i: (0, i)),
        ),
        compiler_params=pltpu.CompilerParams(
            dimension_semantics=("parallel",)),
    )(w1, b1, w2, b2, w3, b3, x_t)

    return jnp.transpose(out_t)  # back to (B, n_out)


def init_params(key, n_in, n_out):
    """Mimic PyTorch nn.Linear default init:
    U(-1/sqrt(fan_in), 1/sqrt(fan_in)) for weight and bias.
    Weights stored (out, in), biases (out, 1)."""
    dims = [(n_in, 5), (5, 3), (3, n_out)]
    params = {}
    for idx, (fi, fo) in enumerate(dims, start=1):
        key, kw, kb = jax.random.split(key, 3)
        bound = 1.0 / jnp.sqrt(jnp.float32(fi))
        params[f"w{idx}"] = jax.random.uniform(
            kw, (fo, fi), jnp.float32, minval=-bound, maxval=bound)
        params[f"b{idx}"] = jax.random.uniform(
            kb, (fo, 1), jnp.float32, minval=-bound, maxval=bound)
    return params


def reference_forward(x, params):
    h1 = jnp.maximum(x @ params["w1"].T + params["b1"].T, 0.0)
    h2 = jnp.maximum(h1 @ params["w2"].T + params["b2"].T, 0.0)
    return jax.nn.sigmoid(h2 @ params["w3"].T + params["b3"].T)


if __name__ == "__main__":
    key = jax.random.PRNGKey(0)
    # Small but lane-friendly shapes: B=512 -> batch tile 256 -> 2 parallel
    # grid steps (pipelined, and shardable across v7x's two TensorCores).
    B, n_in, n_out = 512, 32, 4

    key, kx = jax.random.split(key)
    x = jax.random.normal(kx, (B, n_in), jnp.float32)
    params = init_params(key, n_in, n_out)

    out = mynet_forward(x, params)
    out = jax.block_until_ready(out)

    ref = reference_forward(x, params)
    assert out.shape == (B, n_out)
    assert jnp.allclose(out, ref, atol=1e-5, rtol=1e-5), "mismatch vs reference"

    print("KERNEL_OK")
</pallas_src>

<mosaic_0001>
module attributes {stable_mosaic.version = 11 : i64} {
  func.func @mlp_kernel(%arg0: i32, %arg1: memref<5x32xf32, #tpu.memory_space<vmem>>, %arg2: memref<5x1xf32, #tpu.memory_space<vmem>>, %arg3: memref<3x5xf32, #tpu.memory_space<vmem>>, %arg4: memref<3x1xf32, #tpu.memory_space<vmem>>, %arg5: memref<4x3xf32, #tpu.memory_space<vmem>>, %arg6: memref<4x1xf32, #tpu.memory_space<vmem>>, %arg7: memref<32x256xf32, #tpu.memory_space<vmem>>, %arg8: memref<4x256xf32, #tpu.memory_space<vmem>>) attributes {dimension_semantics = [#tpu.dimension_semantics<parallel>], iteration_bounds = array<i64: 2>, scalar_prefetch = 0 : i64, scratch_operands = 0 : i64, tpu.core_type = #tpu.core_type<tc>, window_params = [{pipeline_mode = #tpu.pipeline_mode<synchronous>, transform_indices = @transform_0, window_bounds = array<i64: 5, 32>}, {pipeline_mode = #tpu.pipeline_mode<synchronous>, transform_indices = @transform_1, window_bounds = array<i64: 5, 1>}, {pipeline_mode = #tpu.pipeline_mode<synchronous>, transform_indices = @transform_2, window_bounds = array<i64: 3, 5>}, {pipeline_mode = #tpu.pipeline_mode<synchronous>, transform_indices = @transform_3, window_bounds = array<i64: 3, 1>}, {pipeline_mode = #tpu.pipeline_mode<synchronous>, transform_indices = @transform_4, window_bounds = array<i64: 4, 3>}, {pipeline_mode = #tpu.pipeline_mode<synchronous>, transform_indices = @transform_5, window_bounds = array<i64: 4, 1>}, {transform_indices = @transform_6, window_bounds = array<i64: 32, 256>}, {transform_indices = @transform_7, window_bounds = array<i64: 4, 256>}]} {
    %c0 = arith.constant 0 : index
    %c0_0 = arith.constant 0 : index
    %0 = vector.load %arg7[%c0, %c0_0] : memref<32x256xf32, #tpu.memory_space<vmem>>, vector<32x256xf32>
    %c0_1 = arith.constant 0 : index
    %c0_2 = arith.constant 0 : index
    %1 = vector.load %arg1[%c0_1, %c0_2] : memref<5x32xf32, #tpu.memory_space<vmem>>, vector<5x32xf32>
    %cst = arith.constant dense<0.000000e+00> : vector<5x256xf32>
    %2 = tpu.matmul %1, %0, %cst {dimension_numbers = #tpu.dot_dimension_numbers<[1], [0], [0], [1], [0, 0, 1, 1], [], []>} : vector<5x32xf32>, vector<32x256xf32>, vector<5x256xf32> -> vector<5x256xf32>
    %c0_3 = arith.constant 0 : index
    %c0_4 = arith.constant 0 : index
    %3 = vector.load %arg2[%c0_3, %c0_4] : memref<5x1xf32, #tpu.memory_space<vmem>>, vector<5x1xf32>
    %4 = vector.broadcast %3 : vector<5x1xf32> to vector<5x256xf32>
    %5 = arith.addf %2, %4 : vector<5x256xf32>
    %cst_5 = arith.constant 0.000000e+00 : f32
    %6 = vector.broadcast %cst_5 : f32 to vector<5x256xf32>
    %7 = arith.maximumf %5, %6 : vector<5x256xf32>
    %c0_6 = arith.constant 0 : index
    %c0_7 = arith.constant 0 : index
    %8 = vector.load %arg3[%c0_6, %c0_7] : memref<3x5xf32, #tpu.memory_space<vmem>>, vector<3x5xf32>
    %cst_8 = arith.constant dense<0.000000e+00> : vector<3x256xf32>
    %9 = tpu.matmul %8, %7, %cst_8 {dimension_numbers = #tpu.dot_dimension_numbers<[1], [0], [0], [1], [0, 0, 1, 1], [], []>} : vector<3x5xf32>, vector<5x256xf32>, vector<3x256xf32> -> vector<3x256xf32>
    %c0_9 = arith.constant 0 : index
    %c0_10 = arith.constant 0 : index
    %10 = vector.load %arg4[%c0_9, %c0_10] : memref<3x1xf32, #tpu.memory_space<vmem>>, vector<3x1xf32>
    %11 = vector.broadcast %10 : vector<3x1xf32> to vector<3x256xf32>
    %12 = arith.addf %9, %11 : vector<3x256xf32>
    %cst_11 = arith.constant 0.000000e+00 : f32
    %13 = vector.broadcast %cst_11 : f32 to vector<3x256xf32>
    %14 = arith.maximumf %12, %13 : vector<3x256xf32>
    %c0_12 = arith.constant 0 : index
    %c0_13 = arith.constant 0 : index
    %15 = vector.load %arg5[%c0_12, %c0_13] : memref<4x3xf32, #tpu.memory_space<vmem>>, vector<4x3xf32>
    %cst_14 = arith.constant dense<0.000000e+00> : vector<4x256xf32>
    %16 = tpu.matmul %15, %14, %cst_14 {dimension_numbers = #tpu.dot_dimension_numbers<[1], [0], [0], [1], [0, 0, 1, 1], [], []>} : vector<4x3xf32>, vector<3x256xf32>, vector<4x256xf32> -> vector<4x256xf32>
    %c0_15 = arith.constant 0 : index
    %c0_16 = arith.constant 0 : index
    %17 = vector.load %arg6[%c0_15, %c0_16] : memref<4x1xf32, #tpu.memory_space<vmem>>, vector<4x1xf32>
    %18 = vector.broadcast %17 : vector<4x1xf32> to vector<4x256xf32>
    %19 = arith.addf %16, %18 : vector<4x256xf32>
    %20 = arith.negf %19 : vector<4x256xf32>
    %21 = math.exp %20 : vector<4x256xf32>
    %cst_17 = arith.constant 1.000000e+00 : f32
    %22 = vector.broadcast %cst_17 : f32 to vector<4x256xf32>
    %23 = arith.addf %22, %21 : vector<4x256xf32>
    %24 = arith.divf %22, %23 : vector<4x256xf32>
    %c0_18 = arith.constant 0 : index
    %c0_19 = arith.constant 0 : index
    %25 = vector.load %arg8[%c0_18, %c0_19] : memref<4x256xf32, #tpu.memory_space<vmem>>, vector<4x256xf32>
    tpu.vector_store %arg8[%c0_18, %c0_19], %24 {strides = array<i32>} : memref<4x256xf32, #tpu.memory_space<vmem>>, vector<4x256xf32>,
    return
  }
  func.func @transform_0(%arg0: i32) -> (i32, i32) {
    %c0_i32 = arith.constant 0 : i32
    %c0_i32_0 = arith.constant 0 : i32
    %c0_i32_1 = arith.constant 0 : i32
    return %c0_i32, %c0_i32_0 : i32, i32
  }
  func.func @transform_1(%arg0: i32) -> (i32, i32) {
    %c0_i32 = arith.constant 0 : i32
    %c0_i32_0 = arith.constant 0 : i32
    %c0_i32_1 = arith.constant 0 : i32
    return %c0_i32, %c0_i32_0 : i32, i32
  }
  func.func @transform_2(%arg0: i32) -> (i32, i32) {
    %c0_i32 = arith.constant 0 : i32
    %c0_i32_0 = arith.constant 0 : i32
    %c0_i32_1 = arith.constant 0 : i32
    return %c0_i32, %c0_i32_0 : i32, i32
  }
  func.func @transform_3(%arg0: i32) -> (i32, i32) {
    %c0_i32 = arith.constant 0 : i32
    %c0_i32_0 = arith.constant 0 : i32
    %c0_i32_1 = arith.constant 0 : i32
    return %c0_i32, %c0_i32_0 : i32, i32
  }
  func.func @transform_4(%arg0: i32) -> (i32, i32) {
    %c0_i32 = arith.constant 0 : i32
    %c0_i32_0 = arith.constant 0 : i32
    %c0_i32_1 = arith.constant 0 : i32
    return %c0_i32, %c0_i32_0 : i32, i32
  }
  func.func @transform_5(%arg0: i32) -> (i32, i32) {
    %c0_i32 = arith.constant 0 : i32
    %c0_i32_0 = arith.constant 0 : i32
    %c0_i32_1 = arith.constant 0 : i32
    return %c0_i32, %c0_i32_0 : i32, i32
  }
  func.func @transform_6(%arg0: i32) -> (i32, i32) {
    %c0_i32 = arith.constant 0 : i32
    %c0_i32_0 = arith.constant 0 : i32
    return %c0_i32, %arg0 : i32, i32
  }
  func.func @transform_7(%arg0: i32) -> (i32, i32) {
    %c0_i32 = arith.constant 0 : i32
    %c0_i32_0 = arith.constant 0 : i32
    return %c0_i32, %arg0 : i32, i32
  }
}

</mosaic_0001>

<llo_original>
// kernel: tpu_custom_call.1
$region0: #{tpu_custom_call.1}
  #allocation0 [shape = 'u32[]', space=smem, size = 0x4, offset = 0x4, fixed_abs, tag = 'smem constant byte address 0x4 - core index']
  #allocation1 [shape = 'u32[144,128]{1,0:T(1,128)}', space=vmem, size = 0x12000, scoped, tag = 'internal scratch']
  %s0 = inlined_call_operand.vmem [shape: f32[5,32], index: 0, kind: input, shape index: {}]
  %s1 = inlined_call_operand.vmem [shape: f32[5,1], index: 1, kind: input, shape index: {}]
  %s2 = inlined_call_operand.vmem [shape: f32[3,5], index: 2, kind: input, shape index: {}]
  %s3 = inlined_call_operand.vmem [shape: f32[3,1], index: 3, kind: input, shape index: {}]
  %s4 = inlined_call_operand.vmem [shape: f32[4,3], index: 4, kind: input, shape index: {}]
  %s5 = inlined_call_operand.vmem [shape: f32[4,1], index: 5, kind: input, shape index: {}]
  %s6 = inlined_call_operand.hbm [shape: f32[32,512], index: 6, kind: input, shape index: {}]
  %s7 = inlined_call_operand.hbm [shape: f32[4,512], index: 7, kind: output, shape index: {}]
  %s8 = sld [smem:[#allocation0]]
  $region65: #{tpu_custom_call.1} parent=0
    _
  %s10 = ssub.s32 1, %s8
  %s11 = scalar_select 0, %s10, %s8
  $region1: #{tpu_custom_call.1} parent=0
    #allocation2 [shape = 'u8[65536]{0}', space=vmem, size = 0x10000, scoped, tag = 'input window, operand 6']
    #allocation3 [shape = 's32[2]{0}', space=sflag, size = 0x8, scoped, tag = 'scoped memory for tpu_custom_call.1']
    #allocation4 [shape = 's32[2]{0}', space=sflag, size = 0x8, scoped, tag = 'scoped memory for tpu_custom_call.1']
    #allocation5 [shape = 'u8[8192]{0}', space=vmem, size = 0x2000, scoped, tag = 'output window, operand 0']
    %12 = vsyncpa [#allocation3], 0
    %s13 = scalar_lea.sflag [#allocation3], 1
    %14 = vsyncpa %s13, 0
    %15 = vsyncpa [#allocation4], 0
    %s16 = scalar_lea.sflag [#allocation4], 1
    %17 = vsyncpa %s16, 0
    loop: start=0, step=1, limit=4
    $region2: #{tpu_custom_call.1} parent=1 // loop_pre_header
      _
    $region3: #{tpu_custom_call.1} parent=1 // loop_header
      %s19 = sphi 0, %s23
      %p20 = scmp.ge.s32.totalorder %s19, 4
      %s27 = sphi 0, %s27
      %s29 = sphi 0, %s27
      %s30 = sphi 0, %s29
      %s44 = sphi 0, %s30
      %s48 = sphi 0, %s48
      %s50 = sphi 0, %s48
      %s51 = sphi 0, %s50
      %s65 = sphi 0, %s51
      %s69 = sphi 0, %s69
      %s71 = sphi 0, %s69
      %s72 = sphi 0, %s71
      %s86 = sphi 0, %s72
      %s90 = sphi 0, %s90
      %s92 = sphi 0, %s90
      %s93 = sphi 0, %s92
      %s107 = sphi 0, %s93
      %s111 = sphi 0, %s111
      %s113 = sphi 0, %s111
      %s114 = sphi 0, %s113
      %s128 = sphi 0, %s114
      %s132 = sphi 0, %s132
      %s134 = sphi 0, %s132
      %s135 = sphi 0, %s134
      %s149 = sphi 0, %s135
      %s155 = sphi 0, %s157
      %s158 = sphi 0, %s155
      %s159 = sphi 0, %s158
      %s175 = sphi 0, %s159
      %s181 = sphi 0, %s183
      %s184 = sphi 0, %s181
      %s185 = sphi 0, %s184
      %s201 = sphi 0, %s185
    $region4: #{tpu_custom_call.1} parent=1 // loop_header_branch
      %22 = sbr.rel (%p20) target = $region8
    $region5: #{tpu_custom_call.1} parent=1 // loop_body
      %s24 = ssub.s32 %s19, 1
      %s25 = ssub.s32 %s19, 2
      %s26 = sadd.s32 %s19, 1
      %s28 = sadd.s32 %s27, 1
      %p31 = scmp.eq.s32.totalorder %s19, 1
      %p32 = scmp.ne.s32.totalorder %s27, %s29
      %p33 = scmp.eq.s32.totalorder %s19, 0
      %p34 = por %p32, %p33
      %p35 = scmp.ne.s32.totalorder %s27, %s29
      %p36 = scmp.eq.s32.totalorder %s24, 1
      %p37 = por %p35, %p36
      %p38 = scmp.ne.s32.totalorder %s29, %s30
      %p39 = scmp.eq.s32.totalorder %s24, 0
      %p40 = por %p38, %p39
      %p41 = scmp.ne.s32.totalorder %s29, %s30
      %p42 = scmp.eq.s32.totalorder %s25, 1
      %p43 = por %p41, %p42
      %p45 = scmp.ne.s32.totalorder %s30, %s44
      %p46 = scmp.eq.s32.totalorder %s25, 0
      %p47 = por %p45, %p46
      %s49 = sadd.s32 %s48, 1
      %p52 = scmp.eq.s32.totalorder %s19, 1
      %p53 = scmp.ne.s32.totalorder %s48, %s50
      %p54 = scmp.eq.s32.totalorder %s19, 0
      %p55 = por %p53, %p54
      %p56 = scmp.ne.s32.totalorder %s48, %s50
      %p57 = scmp.eq.s32.totalorder %s24, 1
      %p58 = por %p56, %p57
      %p59 = scmp.ne.s32.totalorder %s50, %s51
      %p60 = scmp.eq.s32.totalorder %s24, 0
      %p61 = por %p59, %p60
      %p62 = scmp.ne.s32.totalorder %s50, %s51
      %p63 = scmp.eq.s32.totalorder %s25, 1
      %p64 = por %p62, %p63
      %p66 = scmp.ne.s32.totalorder %s51, %s65
      %p67 = scmp.eq.s32.totalorder %s25, 0
      %p68 = por %p66, %p67
      %s70 = sadd.s32 %s69, 1
      %p73 = scmp.eq.s32.totalorder %s19, 1
      %p74 = scmp.ne.s32.totalorder %s69, %s71
      %p75 = scmp.eq.s32.totalorder %s19, 0
      %p76 = por %p74, %p75
      %p77 = scmp.ne.s32.totalorder %s69, %s71
      %p78 = scmp.eq.s32.totalorder %s24, 1
      %p79 = por %p77, %p78
      %p80 = scmp.ne.s32.totalorder %s71, %s72
      %p81 = scmp.eq.s32.totalorder %s24, 0
      %p82 = por %p80, %p81
      %p83 = scmp.ne.s32.totalorder %s71, %s72
      %p84 = scmp.eq.s32.totalorder %s25, 1
      %p85 = por %p83, %p84
      %p87 = scmp.ne.s32.totalorder %s72, %s86
      %p88 = scmp.eq.s32.totalorder %s25, 0
      %p89 = por %p87, %p88
      %s91 = sadd.s32 %s90, 1
      %p94 = scmp.eq.s32.totalorder %s19, 1
      %p95 = scmp.ne.s32.totalorder %s90, %s92
      %p96 = scmp.eq.s32.totalorder %s19, 0
      %p97 = por %p95, %p96
      %p98 = scmp.ne.s32.totalorder %s90, %s92
      %p99 = scmp.eq.s32.totalorder %s24, 1
      %p100 = por %p98, %p99
      %p101 = scmp.ne.s32.totalorder %s92, %s93
      %p102 = scmp.eq.s32.totalorder %s24, 0
      %p103 = por %p101, %p102
      %p104 = scmp.ne.s32.totalorder %s92, %s93
      %p105 = scmp.eq.s32.totalorder %s25, 1
      %p106 = por %p104, %p105
      %p108 = scmp.ne.s32.totalorder %s93, %s107
      %p109 = scmp.eq.s32.totalorder %s25, 0
      %p110 = por %p108, %p109
      %s112 = sadd.s32 %s111, 1
      %p115 = scmp.eq.s32.totalorder %s19, 1
      %p116 = scmp.ne.s32.totalorder %s111, %s113
      %p117 = scmp.eq.s32.totalorder %s19, 0
      %p118 = por %p116, %p117
      %p119 = scmp.ne.s32.totalorder %s111, %s113
      %p120 = scmp.eq.s32.totalorder %s24, 1
      %p121 = por %p119, %p120
      %p122 = scmp.ne.s32.totalorder %s113, %s114
      %p123 = scmp.eq.s32.totalorder %s24, 0
      %p124 = por %p122, %p123
      %p125 = scmp.ne.s32.totalorder %s113, %s114
      %p126 = scmp.eq.s32.totalorder %s25, 1
      %p127 = por %p125, %p126
      %p129 = scmp.ne.s32.totalorder %s114, %s128
      %p130 = scmp.eq.s32.totalorder %s25, 0
      %p131 = por %p129, %p130
      %s133 = sadd.s32 %s132, 1
      %p136 = scmp.eq.s32.totalorder %s19, 1
      %p137 = scmp.ne.s32.totalorder %s132, %s134
      %p138 = scmp.eq.s32.totalorder %s19, 0
      %p139 = por %p137, %p138
      %p140 = scmp.ne.s32.totalorder %s132, %s134
      %p141 = scmp.eq.s32.totalorder %s24, 1
      %p142 = por %p140, %p141
      %p143 = scmp.ne.s32.totalorder %s134, %s135
      %p144 = scmp.eq.s32.totalorder %s24, 0
      %p145 = por %p143, %p144
      %p146 = scmp.ne.s32.totalorder %s134, %s135
      %p147 = scmp.eq.s32.totalorder %s25, 1
      %p148 = por %p146, %p147
      %p150 = scmp.ne.s32.totalorder %s135, %s149
      %p151 = scmp.eq.s32.totalorder %s25, 0
      %p152 = por %p150, %p151
      %s153 = ssub.s32 %s19, %s26
      %p154 = scmp.eq.s32.totalorder %s153, 0
      %s156 = sadd.s32 %s155, 1
      %s157 = scalar_select %p154, %s155, %s156
      %p160 = pneg %p154
      %p161 = scmp.eq.s32.totalorder %s19, 1
      %p162 = por %p160, %p161
      %p163 = scmp.ne.s32.totalorder %s155, %s158
      %p164 = scmp.eq.s32.totalorder %s19, 0
      %p165 = por %p163, %p164
      %p166 = scmp.ne.s32.totalorder %s155, %s158
      %p167 = scmp.eq.s32.totalorder %s24, 1
      %p168 = por %p166, %p167
      %p169 = scmp.ne.s32.totalorder %s158, %s159
      %p170 = scmp.eq.s32.totalorder %s24, 0
      %p171 = por %p169, %p170
      %p172 = scmp.ne.s32.totalorder %s158, %s159
      %p173 = scmp.eq.s32.totalorder %s25, 1
      %p174 = por %p172, %p173
      %p176 = scmp.ne.s32.totalorder %s159, %s175
      %p177 = scmp.eq.s32.totalorder %s25, 0
      %p178 = por %p176, %p177
      %s179 = ssub.s32 %s19, %s26
      %p180 = scmp.eq.s32.totalorder %s179, 0
      %s182 = sadd.s32 %s181, 1
      %s183 = scalar_select %p180, %s181, %s182
      %p186 = pneg %p180
      %p187 = scmp.eq.s32.totalorder %s19, 1
      %p188 = por %p186, %p187
      %p189 = scmp.ne.s32.totalorder %s181, %s184
      %p190 = scmp.eq.s32.totalorder %s19, 0
      %p191 = por %p189, %p190
      %p192 = scmp.ne.s32.totalorder %s181, %s184
      %p193 = scmp.eq.s32.totalorder %s24, 1
      %p194 = por %p192, %p193
      %p195 = scmp.ne.s32.totalorder %s184, %s185
      %p196 = scmp.eq.s32.totalorder %s24, 0
      %p197 = por %p195, %p196
      %p198 = scmp.ne.s32.totalorder %s184, %s185
      %p199 = scmp.eq.s32.totalorder %s25, 1
      %p200 = por %p198, %p199
      %p202 = scmp.ne.s32.totalorder %s185, %s201
      %p203 = scmp.eq.s32.totalorder %s25, 0
      %p204 = por %p202, %p203
      %p205 = scmp.le.s32.totalorder 1, %s19
      %p206 = scmp.lt.s32.totalorder %s19, 3
      %p207 = pnand %p205, %p206
      %p208 = pneg %p207
      // Predicated region
      $region9: #{tpu_custom_call.1} parent=5 // pred_check
        _
      $region10: #{tpu_custom_call.1} parent=5 // pred_check_branch
        %210 = sbr.rel (%p207) target = $region12
      $region11: #{tpu_custom_call.1} parent=5 // pred_region
        %s211 = ssub.s32 %s19, 1
        // Predicated region
        $region13: #{tpu_custom_call.1} parent=11 // pred_check
          %p212 = pneg %p40
        $region14: #{tpu_custom_call.1} parent=11 // pred_check_branch
          %214 = sbr.rel (%p212) target = $region16
        $region15: #{tpu_custom_call.1} parent=11 // pred_region
          _
        $region16: #{tpu_custom_call.1} parent=11 // pred_fallthru
          _
        // Predicated region
        $region17: #{tpu_custom_call.1} parent=11 // pred_check
          %p215 = pneg %p61
        $region18: #{tpu_custom_call.1} parent=11 // pred_check_branch
          %217 = sbr.rel (%p215) target = $region20
        $region19: #{tpu_custom_call.1} parent=11 // pred_region
          _
        $region20: #{tpu_custom_call.1} parent=11 // pred_fallthru
          _
        // Predicated region
        $region21: #{tpu_custom_call.1} parent=11 // pred_check
          %p218 = pneg %p82
        $region22: #{tpu_custom_call.1} parent=11 // pred_check_branch
          %220 = sbr.rel (%p218) target = $region24
        $region23: #{tpu_custom_call.1} parent=11 // pred_region
          _
        $region24: #{tpu_custom_call.1} parent=11 // pred_fallthru
          _
        // Predicated region
        $region25: #{tpu_custom_call.1} parent=11 // pred_check
          %p221 = pneg %p103
        $region26: #{tpu_custom_call.1} parent=11 // pred_check_branch
          %223 = sbr.rel (%p221) target = $region28
        $region27: #{tpu_custom_call.1} parent=11 // pred_region
          _
        $region28: #{tpu_custom_call.1} parent=11 // pred_fallthru
          _
        // Predicated region
        $region29: #{tpu_custom_call.1} parent=11 // pred_check
          %p224 = pneg %p124
        $region30: #{tpu_custom_call.1} parent=11 // pred_check_branch
          %226 = sbr.rel (%p224) target = $region32
        $region31: #{tpu_custom_call.1} parent=11 // pred_region
          _
        $region32: #{tpu_custom_call.1} parent=11 // pred_fallthru
          _
        // Predicated region
        $region33: #{tpu_custom_call.1} parent=11 // pred_check
          %p227 = pneg %p145
        $region34: #{tpu_custom_call.1} parent=11 // pred_check_branch
          %229 = sbr.rel (%p227) target = $region36
        $region35: #{tpu_custom_call.1} parent=11 // pred_region
          _
        $region36: #{tpu_custom_call.1} parent=11 // pred_fallthru
          _
      $region12: #{tpu_custom_call.1} parent=5 // pred_fallthru
        _
      %p230 = scmp.lt.s32.totalorder %s19, 2
      // Predicated region
      $region37: #{tpu_custom_call.1} parent=5 // pred_check
        %p231 = pneg %p230
      $region38: #{tpu_custom_call.1} parent=5 // pred_check_branch
        %233 = sbr.rel (%p231) target = $region40
      $region39: #{tpu_custom_call.1} parent=5 // pred_region
        // Predicated region
        $region41: #{tpu_custom_call.1} parent=39 // pred_check
          %p234 = pneg %p165
        $region42: #{tpu_custom_call.1} parent=39 // pred_check_branch
          %236 = sbr.rel (%p234) target = $region44
        $region43: #{tpu_custom_call.1} parent=39 // pred_region
          %s237 = sand.u32 %s155, 1
          %s238 = scalar_lea.sflag [#allocation3], %s237
          %s239 = sand.u32 %s155, 1
          %s240 = smul.addr %s239, 64
          %s241 = scalar_lea.vmem [#allocation2], %s240
          %s242 = smul.u32 2, %s19
          %s244 = ssub.s32 1024, 1024
          %245 = vsyncadd %s238, %s244
          %s246 = smul.addr %s242, 128
          %s247 = scalar_lea.hbm %s6, %s246
          %s248 = sshll.u32 %s241, 4
          %s249 = int_to_ptr.vmem [resolvable:$true] %s248
          %254 = dma.hbm_to_vmem [thread:$0]  %s247, 1024, %s249, %s238, 512, 256, 16
        $region44: #{tpu_custom_call.1} parent=39 // pred_fallthru
          _
      $region40: #{tpu_custom_call.1} parent=5 // pred_fallthru
        _
      %p255 = scmp.le.s32.totalorder 1, %s19
      %p256 = scmp.lt.s32.totalorder %s19, 3
      %p257 = pnand %p255, %p256
      %p258 = pneg %p257
      // Predicated region
      $region45: #{tpu_custom_call.1} parent=5 // pred_check
        _
      $region46: #{tpu_custom_call.1} parent=5 // pred_check_branch
        %260 = sbr.rel (%p257) target = $region48
      $region47: #{tpu_custom_call.1} parent=5 // pred_region
        %s261 = ssub.s32 %s19, 1
        %s262 = sand.u32 %s158, 1
        %s263 = scalar_lea.sflag [#allocation3], %s262
        %s264 = sand.u32 %s158, 1
        %s265 = smul.addr %s264, 64
        %s266 = scalar_lea.vmem [#allocation2], %s265
        // Predicated region
        $region49: #{tpu_custom_call.1} parent=47 // pred_check
          %p267 = pneg %p171
        $region50: #{tpu_custom_call.1} parent=47 // pred_check_branch
          %269 = sbr.rel (%p267) target = $region52
        $region51: #{tpu_custom_call.1} parent=47 // pred_region
          %270 = dma.done %s263, 1024
        $region52: #{tpu_custom_call.1} parent=47 // pred_fallthru
          _
        %p271 = pneg %p40
        %p272 = pneg %p37
        %p273 = pneg %p61
        %p274 = pneg %p58
        %p275 = pneg %p82
        %p276 = pneg %p79
        %p277 = pneg %p103
        %p278 = pneg %p100
        %p279 = pneg %p124
        %p280 = pneg %p121
        %p281 = pneg %p145
        %p282 = pneg %p142
        %s283 = sand.u32 %s158, 1
        %s284 = scalar_lea.sflag [#allocation3], %s283
        %s285 = sand.u32 %s158, 1
        %s286 = smul.addr %s285, 64
        %s287 = scalar_lea.vmem [#allocation2], %s286
        %p288 = pneg %p171
        %p289 = pneg %p168
        %p290 = pneg %p197
        %p291 = pneg %p194
        %s292 = sand.u32 %s184, 1
        %s293 = scalar_lea.sflag [#allocation4], %s292
        %s294 = sand.u32 %s184, 1
        %s295 = smul.addr %s294, 8
        %s296 = scalar_lea.vmem [#allocation5], %s295
        %s297 = smul.u32 2, %s24
        %s298 = smul.u32 2, %s24
        %v299 = vld [vmem:[%s266] sm:$0xff]
        %v300 = vld [vmem:[%s266 + $0x8] sm:$0xff]
        %v301 = vld [vmem:[%s266 + $0x10] sm:$0xff]
        %v302 = vld [vmem:[%s266 + $0x18] sm:$0xff]
        %v303 = vld [vmem:[%s266 + $0x20] sm:$0xff]
        %v304 = vld [vmem:[%s266 + $0x28] sm:$0xff]
        %v305 = vld [vmem:[%s266 + $0x30] sm:$0xff]
        %v306 = vld [vmem:[%s266 + $0x38] sm:$0xff]
        %v307 = vld [vmem:[%s0] sm:$0x1f]
        %v308 = vld [vmem:[%s1] sm:$0x1f]
        %310 = vset.pattern.permute.xlu0 0
        %311 = vperm.xlu0 %310, %v308
        %v312 = vpop.permute.xlu0 %311
        %vm314 = vcmask 261120
        %v316 = vsel %vm314, %v307, 0
        %318 = vmatprep.subr.mxu0 %v300
        %319 = vmatpush1.msra.mxu0 %v299
        %320 = vmatprep.subr.mxu0 %v302
        %321 = vmatpush1.msra.mxu0 %v301
        %322 = vmatprep.subr.mxu0 %v304
        %323 = vmatpush1.msra.mxu0 %v303
        %324 = vmatprep.subr.mxu0 %v306
        %325 = vmatpush1.msra.mxu0 %v305
        %326 = vmatprep.subr.mxu0 0.0
        %327 = vmatpush1.msra.mxu0 0.0
        %328 = vmatprep.subr.mxu0 0.0
        %329 = vmatpush1.msra.mxu0 0.0
        %330 = vmatprep.subr.mxu0 0.0
        %331 = vmatpush1.msra.mxu0 0.0
        %332 = vmatprep.subr.mxu0 0.0
        %333 = vmatpush1.msra.mxu0 0.0
        %334 = vmatprep.subr.mxu0 0.0
        %335 = vmatpush1.msra.mxu0 0.0
        %336 = vmatprep.subr.mxu0 0.0
        %337 = vmatpush1.msra.mxu0 0.0
        %338 = vmatprep.subr.mxu0 0.0
        %339 = vmatpush1.msra.mxu0 0.0
        %340 = vmatprep.subr.mxu0 0.0
        %341 = vmatpush1.msra.mxu0 0.0
        %342 = vmatprep.subr.mxu0 0.0
        %343 = vmatpush1.msra.mxu0 0.0
        %344 = vmatprep.subr.mxu0 0.0
        %345 = vmatpush1.msra.mxu0 0.0
        %346 = vmatprep.subr.mxu0 0.0
        %347 = vmatpush1.msra.mxu0 0.0
        %348 = vmatprep.subr.mxu0 0.0
        %349 = vmatpush1.msra.mxu0 0.0
        %350 = vmatprep.subr.mxu0 0.0
        %351 = vmatpush1.msra.mxu0 0.0
        %352 = vmatprep.subr.mxu0 0.0
        %353 = vmatpush1.msra.mxu0 0.0
        %354 = vmatprep.subr.mxu0 0.0
        %355 = vmatpush1.msra.mxu0 0.0
        %356 = vmatprep.subr.mxu0 0.0
        %357 = vmatpush1.msra.mxu0 0.0
        %358 = vmatprep.subr.mxu0 0.0
        %359 = vmatpush1.msra.mxu0 0.0
        %360 = vmatprep.subr.mxu0 0.0
        %361 = vmatpush1.msra.mxu0 0.0
        %362 = vmatprep.subr.mxu0 0.0
        %363 = vmatpush1.msra.mxu0 0.0
        %364 = vmatprep.subr.mxu0 0.0
        %365 = vmatpush1.msra.mxu0 0.0
        %366 = vmatprep.subr.mxu0 0.0
        %367 = vmatpush1.msra.mxu0 0.0
        %368 = vmatprep.subr.mxu0 0.0
        %369 = vmatpush1.msra.mxu0 0.0
        %370 = vmatprep.subr.mxu0 0.0
        %371 = vmatpush1.msra.mxu0 0.0
        %372 = vmatprep.subr.mxu0 0.0
        %373 = vmatpush1.msra.mxu0 0.0
        %374 = vmatprep.subr.mxu0 0.0
        %375 = vmatpush1.msra.mxu0 0.0
        %376 = vmatprep.subr.mxu0 0.0
        %377 = vmatpush1.msra.mxu0 0.0
        %378 = vmatprep.subr.mxu0 0.0
        %379 = vmatpush1.msra.mxu0 0.0
        %380 = vmatprep.subr.mxu0 0.0
        %381 = vmatpush1.msra.mxu0 0.0
        %382 = vmatprep.mubr.f32.mxu0 0.0
        %383 = vmatmul.mubr.f32.gmra.mrb[0].mxu0 %v316
        %v384 = vpop.f32.mrb[0].mxu0
        %v385 = vadd.f32 %v312, %v384
        %v386 = vpop.f32.mrb[0].mxu0
        %v387 = vadd.f32 %v312, %v386
        %388 = vdwg.mxu0
        %v389 = vmax.f32 %v385, 0.0
        %v390 = vmax.f32 %v387, 0.0
        %v391 = vld [vmem:[%s2] sm:$0x7]
        %v392 = vld [vmem:[%s3] sm:$0x7]
        %394 = vset.pattern.permute.xlu0 0
        %395 = vperm.xlu0 %394, %v392
        %v396 = vpop.permute.xlu0 %395
        %vm398 = vcmask 39936
        %v400 = vsel %vm398, %v391, 0
        %vm402 = vcmask 1044480
        %v404 = vsel %vm402, %v389, 0
        %v407 = vsel %vm402, %v390, 0
        %409 = vmatprep.subr.mxu0 %v407
        %410 = vmatpush1.msra.mxu0 %v404
        %411 = vmatprep.subr.mxu0 0.0
        %412 = vmatpush1.msra.mxu0 0.0
        %413 = vmatprep.subr.mxu0 0.0
        %414 = vmatpush1.msra.mxu0 0.0
        %415 = vmatprep.subr.mxu0 0.0
        %416 = vmatpush1.msra.mxu0 0.0
        %417 = vmatprep.subr.mxu0 0.0
        %418 = vmatpush1.msra.mxu0 0.0
        %419 = vmatprep.subr.mxu0 0.0
        %420 = vmatpush1.msra.mxu0 0.0
        %421 = vmatprep.subr.mxu0 0.0
        %422 = vmatpush1.msra.mxu0 0.0
        %423 = vmatprep.subr.mxu0 0.0
        %424 = vmatpush1.msra.mxu0 0.0
        %425 = vmatprep.subr.mxu0 0.0
        %426 = vmatpush1.msra.mxu0 0.0
        %427 = vmatprep.subr.mxu0 0.0
        %428 = vmatpush1.msra.mxu0 0.0
        %429 = vmatprep.subr.mxu0 0.0
        %430 = vmatpush1.msra.mxu0 0.0
        %431 = vmatprep.subr.mxu0 0.0
        %432 = vmatpush1.msra.mxu0 0.0
        %433 = vmatprep.subr.mxu0 0.0
        %434 = vmatpush1.msra.mxu0 0.0
        %435 = vmatprep.subr.mxu0 0.0
        %436 = vmatpush1.msra.mxu0 0.0
        %437 = vmatprep.subr.mxu0 0.0
        %438 = vmatpush1.msra.mxu0 0.0
        %439 = vmatprep.subr.mxu0 0.0
        %440 = vmatpush1.msra.mxu0 0.0
        %441 = vmatprep.subr.mxu0 0.0
        %442 = vmatpush1.msra.mxu0 0.0
        %443 = vmatprep.subr.mxu0 0.0
        %444 = vmatpush1.msra.mxu0 0.0
        %445 = vmatprep.subr.mxu0 0.0
        %446 = vmatpush1.msra.mxu0 0.0
        %447 = vmatprep.subr.mxu0 0.0
        %448 = vmatpush1.msra.mxu0 0.0
        %449 = vmatprep.subr.mxu0 0.0
        %450 = vmatpush1.msra.mxu0 0.0
        %451 = vmatprep.subr.mxu0 0.0
        %452 = vmatpush1.msra.mxu0 0.0
        %453 = vmatprep.subr.mxu0 0.0
        %454 = vmatpush1.msra.mxu0 0.0
        %455 = vmatprep.subr.mxu0 0.0
        %456 = vmatpush1.msra.mxu0 0.0
        %457 = vmatprep.subr.mxu0 0.0
        %458 = vmatpush1.msra.mxu0 0.0
        %459 = vmatprep.subr.mxu0 0.0
        %460 = vmatpush1.msra.mxu0 0.0
        %461 = vmatprep.subr.mxu0 0.0
        %462 = vmatpush1.msra.mxu0 0.0
        %463 = vmatprep.subr.mxu0 0.0
        %464 = vmatpush1.msra.mxu0 0.0
        %465 = vmatprep.subr.mxu0 0.0
        %466 = vmatpush1.msra.mxu0 0.0
        %467 = vmatprep.subr.mxu0 0.0
        %468 = vmatpush1.msra.mxu0 0.0
        %469 = vmatprep.subr.mxu0 0.0
        %470 = vmatpush1.msra.mxu0 0.0
        %471 = vmatprep.subr.mxu0 0.0
        %472 = vmatpush1.msra.mxu0 0.0
        %473 = vmatprep.mubr.f32.mxu0 0.0
        %474 = vmatmul.mubr.f32.gmra.mrb[0].mxu0 %v400
        %v475 = vpop.f32.mrb[0].mxu0
        %v476 = vadd.f32 %v396, %v475
        %v477 = vpop.f32.mrb[0].mxu0
        %v478 = vadd.f32 %v396, %v477
        %479 = vdwg.mxu0
        %v480 = vmax.f32 %v476, 0.0
        %v481 = vmax.f32 %v478, 0.0
        %v482 = vld [vmem:[%s4] sm:$0xf]
        %v483 = vld [vmem:[%s5] sm:$0xf]
        %485 = vset.pattern.permute.xlu0 0
        %486 = vperm.xlu0 %485, %v483
        %v487 = vpop.permute.xlu0 %486
        %vm489 = vcmask 23552
        %v491 = vsel %vm489, %v482, 0
        %vm493 = vcmask 1042432
        %v495 = vsel %vm493, %v480, 0
        %v498 = vsel %vm493, %v481, 0
        %500 = vmatprep.subr.mxu0 %v498
        %501 = vmatpush1.msra.mxu0 %v495
        %502 = vmatprep.subr.mxu0 0.0
        %503 = vmatpush1.msra.mxu0 0.0
        %504 = vmatprep.subr.mxu0 0.0
        %505 = vmatpush1.msra.mxu0 0.0
        %506 = vmatprep.subr.mxu0 0.0
        %507 = vmatpush1.msra.mxu0 0.0
        %508 = vmatprep.subr.mxu0 0.0
        %509 = vmatpush1.msra.mxu0 0.0
        %510 = vmatprep.subr.mxu0 0.0
        %511 = vmatpush1.msra.mxu0 0.0
        %512 = vmatprep.subr.mxu0 0.0
        %513 = vmatpush1.msra.mxu0 0.0
        %514 = vmatprep.subr.mxu0 0.0
        %515 = vmatpush1.msra.mxu0 0.0
        %516 = vmatprep.subr.mxu0 0.0
        %517 = vmatpush1.msra.mxu0 0.0
        %518 = vmatprep.subr.mxu0 0.0
        %519 = vmatpush1.msra.mxu0 0.0
        %520 = vmatprep.subr.mxu0 0.0
        %521 = vmatpush1.msra.mxu0 0.0
        %522 = vmatprep.subr.mxu0 0.0
        %523 = vmatpush1.msra.mxu0 0.0
        %524 = vmatprep.subr.mxu0 0.0
        %525 = vmatpush1.msra.mxu0 0.0
        %526 = vmatprep.subr.mxu0 0.0
        %527 = vmatpush1.msra.mxu0 0.0
        %528 = vmatprep.subr.mxu0 0.0
        %529 = vmatpush1.msra.mxu0 0.0
        %530 = vmatprep.subr.mxu0 0.0
        %531 = vmatpush1.msra.mxu0 0.0
        %532 = vmatprep.subr.mxu0 0.0
        %533 = vmatpush1.msra.mxu0 0.0
        %534 = vmatprep.subr.mxu0 0.0
        %535 = vmatpush1.msra.mxu0 0.0
        %536 = vmatprep.subr.mxu0 0.0
        %537 = vmatpush1.msra.mxu0 0.0
        %538 = vmatprep.subr.mxu0 0.0
        %539 = vmatpush1.msra.mxu0 0.0
        %540 = vmatprep.subr.mxu0 0.0
        %541 = vmatpush1.msra.mxu0 0.0
        %542 = vmatprep.subr.mxu0 0.0
        %543 = vmatpush1.msra.mxu0 0.0
        %544 = vmatprep.subr.mxu0 0.0
        %545 = vmatpush1.msra.mxu0 0.0
        %546 = vmatprep.subr.mxu0 0.0
        %547 = vmatpush1.msra.mxu0 0.0
        %548 = vmatprep.subr.mxu0 0.0
        %549 = vmatpush1.msra.mxu0 0.0
        %550 = vmatprep.subr.mxu0 0.0
        %551 = vmatpush1.msra.mxu0 0.0
        %552 = vmatprep.subr.mxu0 0.0
        %553 = vmatpush1.msra.mxu0 0.0
        %554 = vmatprep.subr.mxu0 0.0
        %555 = vmatpush1.msra.mxu0 0.0
        %556 = vmatprep.subr.mxu0 0.0
        %557 = vmatpush1.msra.mxu0 0.0
        %558 = vmatprep.subr.mxu0 0.0
        %559 = vmatpush1.msra.mxu0 0.0
        %560 = vmatprep.subr.mxu0 0.0
        %561 = vmatpush1.msra.mxu0 0.0
        %562 = vmatprep.subr.mxu0 0.0
        %563 = vmatpush1.msra.mxu0 0.0
        %564 = vmatprep.mubr.f32.mxu0 0.0
        %565 = vmatmul.mubr.f32.gmra.mrb[0].mxu0 %v491
        %v566 = vpop.f32.mrb[0].mxu0
        %v567 = vadd.f32 %v487, %v566
        %v568 = vpop.f32.mrb[0].mxu0
        %v569 = vadd.f32 %v487, %v568
        %570 = vdwg.mxu0
        %v571 = vxor.u32 %v567, 2147483648
        %v572 = vxor.u32 %v569, 2147483648
        %v573 = vmul.f32 %v571, 1.442695
        %v574 = vpow.pop %v573
        %v575 = vmul.f32 %v572, 1.442695
        %v576 = vpow.pop %v575
        %v577 = vadd.f32 %v574, 1.0
        %v578 = vadd.f32 %v576, 1.0
        %v579 = vrcp.pop %v577
        %v580 = vmul.f32 1.0, %v579
        %v581 = vrcp.pop %v578
        %v582 = vmul.f32 1.0, %v581
        %v585 = vcombine.low %v580, %v582
        %587 = vst [vmem:[%s296] sm:$0xff] %v585
        %s588 = sand.u32 %s184, 1
        %s589 = scalar_lea.sflag [#allocation4], %s588
        %s590 = sand.u32 %s184, 1
        %s591 = smul.addr %s590, 8
        %s592 = scalar_lea.vmem [#allocation5], %s591
        // Predicated region
        $region53: #{tpu_custom_call.1} parent=47 // pred_check
          %p593 = pneg %p194
        $region54: #{tpu_custom_call.1} parent=47 // pred_check_branch
          %595 = sbr.rel (%p593) target = $region56
        $region55: #{tpu_custom_call.1} parent=47 // pred_region
          %s596 = smul.u32 2, %s24
          %s598 = ssub.s32 128, 128
          %599 = vsyncadd %s589, %s598
          %s600 = smul.addr %s596, 64
          %s601 = scalar_lea.hbm %s7, %s600
          %s603 = sshll.u32 %s592, 4
          %s604 = int_to_ptr.vmem [resolvable:$true] %s603
          %606 = dma.vmem_to_hbm [thread:$0]  %s604, 128, %s601, %s589
        $region56: #{tpu_custom_call.1} parent=47 // pred_fallthru
          _
      $region48: #{tpu_custom_call.1} parent=5 // pred_fallthru
        _
      %p607 = scmp.le.s32.totalorder 2, %s19
      // Predicated region
      $region57: #{tpu_custom_call.1} parent=5 // pred_check
        %p608 = pneg %p607
      $region58: #{tpu_custom_call.1} parent=5 // pred_check_branch
        %610 = sbr.rel (%p608) target = $region60
      $region59: #{tpu_custom_call.1} parent=5 // pred_region
        %s611 = ssub.s32 %s19, 2
        // Predicated region
        $region61: #{tpu_custom_call.1} parent=59 // pred_check
          %p612 = pneg %p200
        $region62: #{tpu_custom_call.1} parent=59 // pred_check_branch
          %614 = sbr.rel (%p612) target = $region64
        $region63: #{tpu_custom_call.1} parent=59 // pred_region
          %s615 = sand.u32 %s185, 1
          %s616 = scalar_lea.sflag [#allocation4], %s615
          %s617 = sand.u32 %s185, 1
          %s618 = smul.addr %s617, 8
          %s619 = scalar_lea.vmem [#allocation5], %s618
          %620 = dma.done %s616, 128
        $region64: #{tpu_custom_call.1} parent=59 // pred_fallthru
          _
      $region60: #{tpu_custom_call.1} parent=5 // pred_fallthru
        _
    $region6: #{tpu_custom_call.1} parent=1 // loop_footer
      %s23 = sadd.s32 1, %s19
    $region7: #{tpu_custom_call.1} parent=1 // loop_footer_branch
      %18 = sbr.rel target = $region3
    $region8: #{tpu_custom_call.1} parent=1 // loop_exit
      _
    %621 = vsyncpa [#allocation3], 1
    %s622 = scalar_lea.sflag [#allocation3], 1
    %623 = vsyncpa %s622, 1
    %624 = vsyncpa [#allocation4], 1
    %s625 = scalar_lea.sflag [#allocation4], 1
    %626 = vsyncpa %s625, 1

</llo_original>
